<compile_context>
chip_gen: v7x
topology: tpu7x:2x2x1
jax: 0.10.0
libtpu: 0.0.40
codegen_flags: <defaults>
</compile_context>

<pallas_src>
import functools
import math

import jax
import jax.numpy as jnp
from jax.experimental import pallas as pl
from jax.experimental.pallas import tpu as pltpu


def _round_up(x, m):
    return ((x + m - 1) // m) * m


def _cross_attn_kernel(inputs_ref, memory_ref, wq_ref, wk_ref,
                       out_ref, argmax_ref, mk_ref, *, inv_scale, sk):
    """One (batch, q-tile) grid step.

    inputs_ref : (1, TQ, Dp) bf16   current batch / q tile
    memory_ref : (1, Sk, Dp) bf16   full memory for this batch (resident across q tiles)
    wq_ref     : (Dp, Hp)    bf16
    wk_ref     : (Dp, Hp)    bf16
    out_ref    : (1, TQ, Dp) bf16
    argmax_ref : (1, TQ, 1)  int32
    mk_ref     : (Sk, Hp)    bf16   VMEM scratch, persists across q tiles
    """
    qi = pl.program_id(1)

    # Key projection: compute once per batch (first q tile), reuse afterwards.
    @pl.when(qi == 0)
    def _():
        mk_ref[...] = jnp.dot(
            memory_ref[0], wk_ref[...],
            preferred_element_type=jnp.float32).astype(jnp.bfloat16)

    # Query projection (fp32 MXU accumulation).  The 1/sqrt(H) attention scale is
    # folded here (smaller (TQ,Hp) tensor) instead of on the (TQ,Sk) score matrix.
    xq = (jnp.dot(inputs_ref[0], wq_ref[...],
                  preferred_element_type=jnp.float32)
          * inv_scale).astype(jnp.bfloat16)

    # Attention scores, kept in fp32 end-to-end.
    scores = jax.lax.dot_general(
        xq, mk_ref[...],
        dimension_numbers=(((1,), (1,)), ((), ())),
        preferred_element_type=jnp.float32)                       # (TQ, Sk) f32

    # Row max: shared by the softmax shift and the argmax.
    row_max = jnp.max(scores, axis=-1, keepdims=True)             # (TQ, 1)

    # argmax over the memory axis (first occurrence on ties), on fp32 scores
    # (softmax is monotone, so this equals argmax of the probs).
    idx = jax.lax.broadcasted_iota(jnp.int32, scores.shape, 1)
    amax = jnp.min(jnp.where(scores == row_max, idx, sk),
                   axis=-1, keepdims=True)                        # (TQ, 1) i32

    # fp32 softmax; the divide goes through the EUP via approximate reciprocal.
    e = jnp.exp(scores - row_max)
    denom = jnp.sum(e, axis=-1, keepdims=True)
    probs = (e * pl.reciprocal(denom, approx=True)).astype(jnp.bfloat16)

    # output = probs @ memory  (bf16 inputs, fp32 accumulation, bf16 store).
    out = jnp.dot(probs, memory_ref[0],
                  preferred_element_type=jnp.float32).astype(jnp.bfloat16)

    out_ref[0] = out          # (TQ, Dp): lane-dense store (Dp % 128 == 0)
    argmax_ref[0] = amax


def _run_pallas(inputs, memory, wq_t, wk_t):
    """inputs (B,Sq,D) bf16, memory (B,Sk,D) bf16, wq_t/wk_t (D,H) bf16."""
    B, Sq, D = inputs.shape
    Sk = memory.shape[1]
    H = wq_t.shape[1]

    # Pad feature dims to the 128-lane width: lane-dense output stores plus a
    # 128-wide MXU contraction. Zero padding leaves the math unchanged.
    Dp = _round_up(D, 128)
    Hp = _round_up(H, 128)
    if Dp != D:
        inputs = jnp.pad(inputs, ((0, 0), (0, 0), (0, Dp - D)))
        memory = jnp.pad(memory, ((0, 0), (0, 0), (0, Dp - D)))
    wq_p = jnp.pad(wq_t, ((0, Dp - D), (0, Hp - H)))
    wk_p = jnp.pad(wk_t, ((0, Dp - D), (0, Hp - H)))

    # q-tile size: 128-row tiles when Sq divides evenly, otherwise whole Sq
    # (a full-extent block dim is always legal regardless of the (8,128) rule).
    TQ = 128 if (Sq % 128 == 0) else Sq
    nq = Sq // TQ

    kernel = functools.partial(_cross_attn_kernel,
                               inv_scale=float(1.0 / math.sqrt(float(H))), sk=Sk)

    out_p, amax3 = pl.pallas_call(
        kernel,
        out_shape=(
            jax.ShapeDtypeStruct((B, Sq, Dp), jnp.bfloat16),
            jax.ShapeDtypeStruct((B, Sq, 1), jnp.int32),
        ),
        grid_spec=pltpu.PrefetchScalarGridSpec(
            num_scalar_prefetch=0,
            grid=(B, nq),
            in_specs=[
                pl.BlockSpec((1, TQ, Dp), lambda b, q: (b, q, 0)),   # inputs
                pl.BlockSpec((1, Sk, Dp), lambda b, q: (b, 0, 0)),   # memory
                pl.BlockSpec((Dp, Hp), lambda b, q: (0, 0)),         # wq
                pl.BlockSpec((Dp, Hp), lambda b, q: (0, 0)),         # wk
            ],
            out_specs=(
                pl.BlockSpec((1, TQ, Dp), lambda b, q: (b, q, 0)),   # output
                pl.BlockSpec((1, TQ, 1), lambda b, q: (b, q, 0)),    # argmax
            ),
            scratch_shapes=[pltpu.VMEM((Sk, Hp), jnp.bfloat16)],
        ),
        compiler_params=pltpu.CompilerParams(
            dimension_semantics=("parallel", "arbitrary"),
            vmem_limit_bytes=32 * 1024 * 1024,
        ),
    )(inputs, memory, wq_p, wk_p)

    if Dp != D:
        out_p = out_p[:, :, :D]
    return out_p, amax3[:, :, 0]


@jax.jit
def _cross_attention_device(inputs, memory, wq_t, wk_t, seg_num):
    inputs = inputs.astype(jnp.bfloat16)
    memory = memory.astype(jnp.bfloat16)
    output, amax = _run_pallas(inputs, memory, wq_t, wk_t)
    hist = seg_num - amax            # (B, Sq) int32, fused on device
    return output, hist


def cross_attention_memory(memory, inputs, wq_t, wk_t,
                           mode='train', seg_num=0, browse_thres=4):
    """JAX/Pallas equivalent of CrossAttentionMemory.forward."""
    del mode  # unused by the forward math (parity with the torch module)
    if memory is None:
        return (None, None, False)
    output, hist_dev = _cross_attention_device(inputs, memory, wq_t, wk_t, seg_num)
    # One bulk device->host transfer for the histogram; `output` stays on device.
    hist = jax.device_get(hist_dev).reshape(-1).tolist()
    browse = bool(hist[0] < browse_thres)
    return (output, hist, browse)


if __name__ == "__main__":
    # Small deterministic example shapes consistent with the module.
    B, Sq, Sk, D, H = 2, 8, 8, 32, 32

    key = jax.random.PRNGKey(0)
    k_in, k_mem, k_wq, k_wk = jax.random.split(key, 4)

    inputs = jax.random.normal(k_in, (B, Sq, D), dtype=jnp.float32)
    memory = jax.random.normal(k_mem, (B, Sk, D), dtype=jnp.float32)

    # torch Linear weights are (H, D); we store them pre-transposed as (D, H).
    bound = 1.0 / math.sqrt(D)
    wq_t = jax.random.uniform(k_wq, (D, H), minval=-bound, maxval=bound
                              ).astype(jnp.bfloat16)
    wk_t = jax.random.uniform(k_wk, (D, H), minval=-bound, maxval=bound
                              ).astype(jnp.bfloat16)

    output, hist, browse = cross_attention_memory(
        memory, inputs, wq_t, wk_t, mode='train', seg_num=3, browse_thres=4)

    assert output.shape == (B, Sq, D) and output.dtype == jnp.bfloat16
    assert len(hist) == B * Sq
    assert isinstance(browse, bool)
    jax.block_until_ready(output)
    print("KERNEL_OK")
</pallas_src>

<mosaic_0001>
module attributes {stable_mosaic.version = 11 : i64} {
  func.func @_cross_attn_kernel(%arg0: i32, %arg1: i32, %arg2: memref<1x8x128xbf16, #tpu.memory_space<vmem>>, %arg3: memref<1x8x128xbf16, #tpu.memory_space<vmem>>, %arg4: memref<128x128xbf16, #tpu.memory_space<vmem>>, %arg5: memref<128x128xbf16, #tpu.memory_space<vmem>>, %arg6: memref<1x8x128xbf16, #tpu.memory_space<vmem>>, %arg7: memref<1x8x1xi32, #tpu.memory_space<vmem>>, %arg8: memref<8x128xbf16, #tpu.memory_space<vmem>>) attributes {dimension_semantics = [#tpu.dimension_semantics<parallel>, #tpu.dimension_semantics<arbitrary>], iteration_bounds = array<i64: 2, 1>, scalar_prefetch = 0 : i64, scratch_operands = 1 : i64, tpu.core_type = #tpu.core_type<tc>, window_params = [{transform_indices = @transform_0, window_bounds = array<i64: 1, 8, 128>}, {transform_indices = @transform_1, window_bounds = array<i64: 1, 8, 128>}, {pipeline_mode = #tpu.pipeline_mode<synchronous>, transform_indices = @transform_2, window_bounds = array<i64: 128, 128>}, {pipeline_mode = #tpu.pipeline_mode<synchronous>, transform_indices = @transform_3, window_bounds = array<i64: 128, 128>}, {transform_indices = @transform_4, window_bounds = array<i64: 1, 8, 128>}, {transform_indices = @transform_5, window_bounds = array<i64: 1, 8, 1>}]} {
    %c0_i32 = arith.constant 0 : i32
    %0 = arith.cmpi eq, %arg1, %c0_i32 : i32
    %1 = arith.extui %0 : i1 to i32
    %c0_i32_0 = arith.constant 0 : i32
    %2 = arith.cmpi ne, %1, %c0_i32_0 : i32
    scf.if %2 {
      %c0_22 = arith.constant 0 : index
      %c0_23 = arith.constant 0 : index
      %c0_24 = arith.constant 0 : index
      %40 = vector.load %arg3[%c0_22, %c0_23, %c0_24] : memref<1x8x128xbf16, #tpu.memory_space<vmem>>, vector<1x8x128xbf16>
      %41 = vector.shape_cast %40 : vector<1x8x128xbf16> to vector<8x128xbf16>
      %c0_25 = arith.constant 0 : index
      %c0_26 = arith.constant 0 : index
      %42 = vector.load %arg5[%c0_25, %c0_26] : memref<128x128xbf16, #tpu.memory_space<vmem>>, vector<128x128xbf16>
      %cst_27 = arith.constant dense<0.000000e+00> : vector<8x128xf32>
      %43 = tpu.matmul %41, %42, %cst_27 {dimension_numbers = #tpu.dot_dimension_numbers<[1], [0], [0], [1], [0, 0, 1, 1], [], []>} : vector<8x128xbf16>, vector<128x128xbf16>, vector<8x128xf32> -> vector<8x128xf32>
      %44 = arith.truncf %43 : vector<8x128xf32> to vector<8x128xbf16>
      %c0_28 = arith.constant 0 : index
      %c0_29 = arith.constant 0 : index
      %45 = vector.load %arg8[%c0_28, %c0_29] : memref<8x128xbf16, #tpu.memory_space<vmem>>, vector<8x128xbf16>
      tpu.vector_store %arg8[%c0_28, %c0_29], %44 {strides = array<i32>} : memref<8x128xbf16, #tpu.memory_space<vmem>>, vector<8x128xbf16>,
    } else {
    }
    %c0 = arith.constant 0 : index
    %c0_1 = arith.constant 0 : index
    %c0_2 = arith.constant 0 : index
    %3 = vector.load %arg2[%c0, %c0_1, %c0_2] : memref<1x8x128xbf16, #tpu.memory_space<vmem>>, vector<1x8x128xbf16>
    %4 = vector.shape_cast %3 : vector<1x8x128xbf16> to vector<8x128xbf16>
    %c0_3 = arith.constant 0 : index
    %c0_4 = arith.constant 0 : index
    %5 = vector.load %arg4[%c0_3, %c0_4] : memref<128x128xbf16, #tpu.memory_space<vmem>>, vector<128x128xbf16>
    %cst = arith.constant dense<0.000000e+00> : vector<8x128xf32>
    %6 = tpu.matmul %4, %5, %cst {dimension_numbers = #tpu.dot_dimension_numbers<[1], [0], [0], [1], [0, 0, 1, 1], [], []>} : vector<8x128xbf16>, vector<128x128xbf16>, vector<8x128xf32> -> vector<8x128xf32>
    %cst_5 = arith.constant 0.176776692 : f32
    %7 = vector.broadcast %cst_5 : f32 to vector<8x128xf32>
    %8 = arith.mulf %6, %7 : vector<8x128xf32>
    %9 = arith.truncf %8 : vector<8x128xf32> to vector<8x128xbf16>
    %c0_6 = arith.constant 0 : index
    %c0_7 = arith.constant 0 : index
    %10 = vector.load %arg8[%c0_6, %c0_7] : memref<8x128xbf16, #tpu.memory_space<vmem>>, vector<8x128xbf16>
    %cst_8 = arith.constant dense<0.000000e+00> : vector<8x8xf32>
    %11 = tpu.matmul %9, %10, %cst_8 {dimension_numbers = #tpu.dot_dimension_numbers<[1], [1], [0], [0], [0, 0, 1, 0], [], []>} : vector<8x128xbf16>, vector<8x128xbf16>, vector<8x8xf32> -> vector<8x8xf32>
    %cst_9 = arith.constant dense<0xFF800000> : vector<8xf32>
    %12 = vector.multi_reduction <maximumf>, %11, %cst_9 [1] : vector<8x8xf32> to vector<8xf32>
    %13 = vector.shape_cast %12 : vector<8xf32> to vector<8x1xf32>
    %14 = tpu.iota {dimensions = array<i32: 1>} : vector<8x8xi32>
    %15 = vector.broadcast %13 : vector<8x1xf32> to vector<8x8xf32>
    %16 = arith.cmpf oeq, %11, %15 : vector<8x8xf32>
    %c8_i32 = arith.constant 8 : i32
    %17 = vector.broadcast %c8_i32 : i32 to vector<8x8xi32>
    %18 = arith.select %16, %14, %17 : vector<8x8xi1>, vector<8x8xi32>
    %cst_10 = arith.constant dense<2147483647> : vector<8xi32>
    %19 = vector.multi_reduction <minsi>, %18, %cst_10 [1] : vector<8x8xi32> to vector<8xi32>
    %20 = vector.shape_cast %19 : vector<8xi32> to vector<8x1xi32>
    %21 = vector.broadcast %13 : vector<8x1xf32> to vector<8x8xf32>
    %22 = arith.subf %11, %21 : vector<8x8xf32>
    %23 = math.exp %22 : vector<8x8xf32>
    %cst_11 = arith.constant dense<0.000000e+00> : vector<8xf32>
    %24 = vector.multi_reduction <add>, %23, %cst_11 [1] : vector<8x8xf32> to vector<8xf32>
    %25 = vector.shape_cast %24 : vector<8xf32> to vector<8x1xf32>
    %26 = tpu.reciprocal %25 {approx = true} : vector<8x1xf32> -> vector<8x1xf32>
    %27 = vector.broadcast %26 : vector<8x1xf32> to vector<8x8xf32>
    %28 = arith.mulf %23, %27 : vector<8x8xf32>
    %29 = arith.truncf %28 : vector<8x8xf32> to vector<8x8xbf16>
    %c0_12 = arith.constant 0 : index
    %c0_13 = arith.constant 0 : index
    %c0_14 = arith.constant 0 : index
    %30 = vector.load %arg3[%c0_12, %c0_13, %c0_14] : memref<1x8x128xbf16, #tpu.memory_space<vmem>>, vector<1x8x128xbf16>
    %31 = vector.shape_cast %30 : vector<1x8x128xbf16> to vector<8x128xbf16>
    %cst_15 = arith.constant dense<0.000000e+00> : vector<8x128xf32>
    %32 = tpu.matmul %29, %31, %cst_15 {dimension_numbers = #tpu.dot_dimension_numbers<[1], [0], [0], [1], [0, 0, 1, 1], [], []>} : vector<8x8xbf16>, vector<8x128xbf16>, vector<8x128xf32> -> vector<8x128xf32>
    %33 = arith.truncf %32 : vector<8x128xf32> to vector<8x128xbf16>
    %c0_16 = arith.constant 0 : index
    %c0_17 = arith.constant 0 : index
    %c0_18 = arith.constant 0 : index
    %34 = vector.load %arg6[%c0_16, %c0_17, %c0_18] : memref<1x8x128xbf16, #tpu.memory_space<vmem>>, vector<1x8x128xbf16>
    %35 = vector.shape_cast %34 : vector<1x8x128xbf16> to vector<8x128xbf16>
    %36 = vector.shape_cast %33 : vector<8x128xbf16> to vector<1x8x128xbf16>
    tpu.vector_store %arg6[%c0_16, %c0_17, %c0_18], %36 {strides = array<i32>} : memref<1x8x128xbf16, #tpu.memory_space<vmem>>, vector<1x8x128xbf16>,
    %c0_19 = arith.constant 0 : index
    %c0_20 = arith.constant 0 : index
    %c0_21 = arith.constant 0 : index
    %37 = vector.load %arg7[%c0_19, %c0_20, %c0_21] : memref<1x8x1xi32, #tpu.memory_space<vmem>>, vector<1x8x1xi32>
    %38 = vector.shape_cast %37 : vector<1x8x1xi32> to vector<8x1xi32>
    %39 = vector.shape_cast %20 : vector<8x1xi32> to vector<1x8x1xi32>
    tpu.vector_store %arg7[%c0_19, %c0_20, %c0_21], %39 {strides = array<i32>} : memref<1x8x1xi32, #tpu.memory_space<vmem>>, vector<1x8x1xi32>,
    return
  }
  func.func @transform_0(%arg0: i32, %arg1: i32) -> (i32, i32, i32) {
    %c0_i32 = arith.constant 0 : i32
    %c0_i32_0 = arith.constant 0 : i32
    return %arg0, %arg1, %c0_i32 : i32, i32, i32
  }
  func.func @transform_1(%arg0: i32, %arg1: i32) -> (i32, i32, i32) {
    %c0_i32 = arith.constant 0 : i32
    %c0_i32_0 = arith.constant 0 : i32
    %c0_i32_1 = arith.constant 0 : i32
    return %arg0, %c0_i32, %c0_i32_0 : i32, i32, i32
  }
  func.func @transform_2(%arg0: i32, %arg1: i32) -> (i32, i32) {
    %c0_i32 = arith.constant 0 : i32
    %c0_i32_0 = arith.constant 0 : i32
    %c0_i32_1 = arith.constant 0 : i32
    return %c0_i32, %c0_i32_0 : i32, i32
  }
  func.func @transform_3(%arg0: i32, %arg1: i32) -> (i32, i32) {
    %c0_i32 = arith.constant 0 : i32
    %c0_i32_0 = arith.constant 0 : i32
    %c0_i32_1 = arith.constant 0 : i32
    return %c0_i32, %c0_i32_0 : i32, i32
  }
  func.func @transform_4(%arg0: i32, %arg1: i32) -> (i32, i32, i32) {
    %c0_i32 = arith.constant 0 : i32
    %c0_i32_0 = arith.constant 0 : i32
    return %arg0, %arg1, %c0_i32 : i32, i32, i32
  }
  func.func @transform_5(%arg0: i32, %arg1: i32) -> (i32, i32, i32) {
    %c0_i32 = arith.constant 0 : i32
    %c0_i32_0 = arith.constant 0 : i32
    return %arg0, %arg1, %c0_i32 : i32, i32, i32
  }
}

</mosaic_0001>

<llo_original>
// kernel: _cross_attention_device.1
$region0: #{_cross_attention_device.1}
  #allocation0 [shape = 'u32[]', space=smem, size = 0x4, offset = 0x4, fixed_abs, tag = 'smem constant byte address 0x4 - core index']
  #allocation1 [shape = 'u32[144,128]{1,0:T(1,128)}', space=vmem, size = 0x12000, scoped, tag = 'internal scratch']
  #allocation2 [shape = 'bf16[8,128]{1,0:T(8,128)(2,1)}', space=vmem, size = 0x800, scoped, tag = 'scratch operand']
  %s0 = inlined_call_operand.vmem [shape: bf16[2,8,128], index: 0, kind: input, shape index: {}]
  %s1 = inlined_call_operand.vmem [shape: bf16[2,8,128], index: 1, kind: input, shape index: {}]
  %s2 = inlined_call_operand.vmem [shape: bf16[128,128], index: 2, kind: input, shape index: {}]
  %s3 = inlined_call_operand.vmem [shape: bf16[128,128], index: 3, kind: input, shape index: {}]
  %s4 = inlined_call_operand.hbm [shape: bf16[2,8,128], index: 4, kind: output, shape index: {0}]
  %s5 = inlined_call_operand.vmem [shape: s32[2,8,1], index: 5, kind: output, shape index: {1}]
  %6 = xla_tuple %s4, %s5
  %s7 = sld [smem:[#allocation0]]
  $region61: #{_cross_attention_device.1} parent=0
    _
  %s9 = ssub.s32 1, %s7
  %s10 = scalar_select 0, %s9, %s7
  $region1: #{_cross_attention_device.1} parent=0
    #allocation3 [shape = 'u8[4096]{0}', space=vmem, size = 0x1000, scoped, tag = 'output window, operand 0']
    #allocation4 [shape = 's32[2]{0}', space=sflag, size = 0x8, scoped, tag = 'scoped memory for _cross_attention_device.1']
    %11 = vsyncpa [#allocation4], 0
    %s12 = scalar_lea.sflag [#allocation4], 1
    %13 = vsyncpa %s12, 0
    loop: start=0, step=1, limit=4
    $region2: #{_cross_attention_device.1} parent=1 // loop_pre_header
      _
    $region3: #{_cross_attention_device.1} parent=1 // loop_header
      %s15 = sphi 0, %s19
      %p16 = scmp.ge.s32.totalorder %s15, 4
      %s22 = sphi 0, %s34
      %s23 = sphi 0, %s30
      %s24 = sphi 0, %s22
      %s25 = sphi 0, %s23
      %s26 = sphi 0, %s24
      %s27 = sphi 0, %s25
      %s39 = sphi 0, %s41
      %s42 = sphi 0, %s39
      %s43 = sphi 0, %s42
      %s59 = sphi 0, %s43
      %s65 = sphi 0, %s67
      %s68 = sphi 0, %s65
      %s69 = sphi 0, %s68
      %s85 = sphi 0, %s69
      %s89 = sphi 0, %s89
      %s91 = sphi 0, %s89
      %s92 = sphi 0, %s91
      %s106 = sphi 0, %s92
      %s110 = sphi 0, %s110
      %s112 = sphi 0, %s110
      %s113 = sphi 0, %s112
      %s127 = sphi 0, %s113
      %s135 = sphi 0, %s137
      %s138 = sphi 0, %s135
      %s139 = sphi 0, %s138
      %s155 = sphi 0, %s139
      %s163 = sphi 0, %s165
      %s166 = sphi 0, %s163
      %s167 = sphi 0, %s166
      %s183 = sphi 0, %s167
    $region4: #{_cross_attention_device.1} parent=1 // loop_header_branch
      %18 = sbr.rel (%p16) target = $region8
    $region5: #{_cross_attention_device.1} parent=1 // loop_body
      %s20 = ssub.s32 %s15, 1
      %s21 = ssub.s32 %s15, 2
      %s28 = sadd.s32 1, %s23
      %p29 = scmp.ge.s32.totalorder %s28, 1
      %s30 = scalar_select %p29, 0, %s28
      %s31 = sadd.s32 1, %s22
      %s32 = scalar_select %p29, %s31, %s22
      %p33 = scmp.ge.s32.totalorder %s32, 2
      %s34 = scalar_select %p33, 0, %s32
      %s35 = ssub.s32 %s22, %s34
      %s36 = ssub.s32 %s23, %s30
      %s37 = sor.u32 %s35, %s36
      %p38 = scmp.eq.s32.totalorder %s37, 0
      %s40 = sadd.s32 %s39, 1
      %s41 = scalar_select %p38, %s39, %s40
      %p44 = pneg %p38
      %p45 = scmp.eq.s32.totalorder %s15, 1
      %p46 = por %p44, %p45
      %p47 = scmp.ne.s32.totalorder %s39, %s42
      %p48 = scmp.eq.s32.totalorder %s15, 0
      %p49 = por %p47, %p48
      %p50 = scmp.ne.s32.totalorder %s39, %s42
      %p51 = scmp.eq.s32.totalorder %s20, 1
      %p52 = por %p50, %p51
      %p53 = scmp.ne.s32.totalorder %s42, %s43
      %p54 = scmp.eq.s32.totalorder %s20, 0
      %p55 = por %p53, %p54
      %p56 = scmp.ne.s32.totalorder %s42, %s43
      %p57 = scmp.eq.s32.totalorder %s21, 1
      %p58 = por %p56, %p57
      %p60 = scmp.ne.s32.totalorder %s43, %s59
      %p61 = scmp.eq.s32.totalorder %s21, 0
      %p62 = por %p60, %p61
      %s63 = ssub.s32 %s22, %s34
      %p64 = scmp.eq.s32.totalorder %s63, 0
      %s66 = sadd.s32 %s65, 1
      %s67 = scalar_select %p64, %s65, %s66
      %p70 = pneg %p64
      %p71 = scmp.eq.s32.totalorder %s15, 1
      %p72 = por %p70, %p71
      %p73 = scmp.ne.s32.totalorder %s65, %s68
      %p74 = scmp.eq.s32.totalorder %s15, 0
      %p75 = por %p73, %p74
      %p76 = scmp.ne.s32.totalorder %s65, %s68
      %p77 = scmp.eq.s32.totalorder %s20, 1
      %p78 = por %p76, %p77
      %p79 = scmp.ne.s32.totalorder %s68, %s69
      %p80 = scmp.eq.s32.totalorder %s20, 0
      %p81 = por %p79, %p80
      %p82 = scmp.ne.s32.totalorder %s68, %s69
      %p83 = scmp.eq.s32.totalorder %s21, 1
      %p84 = por %p82, %p83
      %p86 = scmp.ne.s32.totalorder %s69, %s85
      %p87 = scmp.eq.s32.totalorder %s21, 0
      %p88 = por %p86, %p87
      %s90 = sadd.s32 %s89, 1
      %p93 = scmp.eq.s32.totalorder %s15, 1
      %p94 = scmp.ne.s32.totalorder %s89, %s91
      %p95 = scmp.eq.s32.totalorder %s15, 0
      %p96 = por %p94, %p95
      %p97 = scmp.ne.s32.totalorder %s89, %s91
      %p98 = scmp.eq.s32.totalorder %s20, 1
      %p99 = por %p97, %p98
      %p100 = scmp.ne.s32.totalorder %s91, %s92
      %p101 = scmp.eq.s32.totalorder %s20, 0
      %p102 = por %p100, %p101
      %p103 = scmp.ne.s32.totalorder %s91, %s92
      %p104 = scmp.eq.s32.totalorder %s21, 1
      %p105 = por %p103, %p104
      %p107 = scmp.ne.s32.totalorder %s92, %s106
      %p108 = scmp.eq.s32.totalorder %s21, 0
      %p109 = por %p107, %p108
      %s111 = sadd.s32 %s110, 1
      %p114 = scmp.eq.s32.totalorder %s15, 1
      %p115 = scmp.ne.s32.totalorder %s110, %s112
      %p116 = scmp.eq.s32.totalorder %s15, 0
      %p117 = por %p115, %p116
      %p118 = scmp.ne.s32.totalorder %s110, %s112
      %p119 = scmp.eq.s32.totalorder %s20, 1
      %p120 = por %p118, %p119
      %p121 = scmp.ne.s32.totalorder %s112, %s113
      %p122 = scmp.eq.s32.totalorder %s20, 0
      %p123 = por %p121, %p122
      %p124 = scmp.ne.s32.totalorder %s112, %s113
      %p125 = scmp.eq.s32.totalorder %s21, 1
      %p126 = por %p124, %p125
      %p128 = scmp.ne.s32.totalorder %s113, %s127
      %p129 = scmp.eq.s32.totalorder %s21, 0
      %p130 = por %p128, %p129
      %s131 = ssub.s32 %s22, %s34
      %s132 = ssub.s32 %s23, %s30
      %s133 = sor.u32 %s131, %s132
      %p134 = scmp.eq.s32.totalorder %s133, 0
      %s136 = sadd.s32 %s135, 1
      %s137 = scalar_select %p134, %s135, %s136
      %p140 = pneg %p134
      %p141 = scmp.eq.s32.totalorder %s15, 1
      %p142 = por %p140, %p141
      %p143 = scmp.ne.s32.totalorder %s135, %s138
      %p144 = scmp.eq.s32.totalorder %s15, 0
      %p145 = por %p143, %p144
      %p146 = scmp.ne.s32.totalorder %s135, %s138
      %p147 = scmp.eq.s32.totalorder %s20, 1
      %p148 = por %p146, %p147
      %p149 = scmp.ne.s32.totalorder %s138, %s139
      %p150 = scmp.eq.s32.totalorder %s20, 0
      %p151 = por %p149, %p150
      %p152 = scmp.ne.s32.totalorder %s138, %s139
      %p153 = scmp.eq.s32.totalorder %s21, 1
      %p154 = por %p152, %p153
      %p156 = scmp.ne.s32.totalorder %s139, %s155
      %p157 = scmp.eq.s32.totalorder %s21, 0
      %p158 = por %p156, %p157
      %s159 = ssub.s32 %s22, %s34
      %s160 = ssub.s32 %s23, %s30
      %s161 = sor.u32 %s159, %s160
      %p162 = scmp.eq.s32.totalorder %s161, 0
      %s164 = sadd.s32 %s163, 1
      %s165 = scalar_select %p162, %s163, %s164
      %p168 = pneg %p162
      %p169 = scmp.eq.s32.totalorder %s15, 1
      %p170 = por %p168, %p169
      %p171 = scmp.ne.s32.totalorder %s163, %s166
      %p172 = scmp.eq.s32.totalorder %s15, 0
      %p173 = por %p171, %p172
      %p174 = scmp.ne.s32.totalorder %s163, %s166
      %p175 = scmp.eq.s32.totalorder %s20, 1
      %p176 = por %p174, %p175
      %p177 = scmp.ne.s32.totalorder %s166, %s167
      %p178 = scmp.eq.s32.totalorder %s20, 0
      %p179 = por %p177, %p178
      %p180 = scmp.ne.s32.totalorder %s166, %s167
      %p181 = scmp.eq.s32.totalorder %s21, 1
      %p182 = por %p180, %p181
      %p184 = scmp.ne.s32.totalorder %s167, %s183
      %p185 = scmp.eq.s32.totalorder %s21, 0
      %p186 = por %p184, %p185
      %p187 = scmp.le.s32.totalorder 1, %s15
      %p188 = scmp.lt.s32.totalorder %s15, 3
      %p189 = pnand %p187, %p188
      %p190 = pneg %p189
      // Predicated region
      $region9: #{_cross_attention_device.1} parent=5 // pred_check
        _
      $region10: #{_cross_attention_device.1} parent=5 // pred_check_branch
        %192 = sbr.rel (%p189) target = $region12
      $region11: #{_cross_attention_device.1} parent=5 // pred_region
        %s193 = ssub.s32 %s15, 1
        // Predicated region
        $region13: #{_cross_attention_device.1} parent=11 // pred_check
          %p194 = pneg %p102
        $region14: #{_cross_attention_device.1} parent=11 // pred_check_branch
          %196 = sbr.rel (%p194) target = $region16
        $region15: #{_cross_attention_device.1} parent=11 // pred_region
          _
        $region16: #{_cross_attention_device.1} parent=11 // pred_fallthru
          _
        // Predicated region
        $region17: #{_cross_attention_device.1} parent=11 // pred_check
          %p197 = pneg %p123
        $region18: #{_cross_attention_device.1} parent=11 // pred_check_branch
          %199 = sbr.rel (%p197) target = $region20
        $region19: #{_cross_attention_device.1} parent=11 // pred_region
          _
        $region20: #{_cross_attention_device.1} parent=11 // pred_fallthru
          _
      $region12: #{_cross_attention_device.1} parent=5 // pred_fallthru
        _
      %p200 = scmp.lt.s32.totalorder %s15, 2
      // Predicated region
      $region21: #{_cross_attention_device.1} parent=5 // pred_check
        %p201 = pneg %p200
      $region22: #{_cross_attention_device.1} parent=5 // pred_check_branch
        %203 = sbr.rel (%p201) target = $region24
      $region23: #{_cross_attention_device.1} parent=5 // pred_region
        // Predicated region
        $region25: #{_cross_attention_device.1} parent=23 // pred_check
          %p204 = pneg %p49
        $region26: #{_cross_attention_device.1} parent=23 // pred_check_branch
          %206 = sbr.rel (%p204) target = $region28
        $region27: #{_cross_attention_device.1} parent=23 // pred_region
          %p207 = scmp.lt.s32.totalorder %s22, 1
          %s208 = scalar_select %p207, %s22, 1
          %p209 = scmp.lt.s32.totalorder %s23, 0
          %s210 = scalar_select %p209, %s23, 0
          %s211 = sadd.s32 %s210, %s208
          %s212 = smul.addr %s211, 4
          %s213 = scalar_lea.vmem %s0, %s212
        $region28: #{_cross_attention_device.1} parent=23 // pred_fallthru
          _
        // Predicated region
        $region29: #{_cross_attention_device.1} parent=23 // pred_check
          %p214 = pneg %p75
        $region30: #{_cross_attention_device.1} parent=23 // pred_check_branch
          %216 = sbr.rel (%p214) target = $region32
        $region31: #{_cross_attention_device.1} parent=23 // pred_region
          %p217 = scmp.lt.s32.totalorder %s22, 1
          %s218 = scalar_select %p217, %s22, 1
          %s219 = smul.addr %s218, 4
          %s220 = scalar_lea.vmem %s1, %s219
        $region32: #{_cross_attention_device.1} parent=23 // pred_fallthru
          _
      $region24: #{_cross_attention_device.1} parent=5 // pred_fallthru
        _
      %p221 = scmp.le.s32.totalorder 1, %s15
      %p222 = scmp.lt.s32.totalorder %s15, 3
      %p223 = pnand %p221, %p222
      %p224 = pneg %p223
      // Predicated region
      $region33: #{_cross_attention_device.1} parent=5 // pred_check
        _
      $region34: #{_cross_attention_device.1} parent=5 // pred_check_branch
        %226 = sbr.rel (%p223) target = $region36
      $region35: #{_cross_attention_device.1} parent=5 // pred_region
        %s227 = ssub.s32 %s15, 1
        %p228 = scmp.lt.s32.totalorder %s24, 1
        %s229 = scalar_select %p228, %s24, 1
        %p230 = scmp.lt.s32.totalorder %s25, 0
        %s231 = scalar_select %p230, %s25, 0
        %s232 = sadd.s32 %s231, %s229
        %s233 = smul.addr %s232, 4
        %s234 = scalar_lea.vmem %s0, %s233
        %p235 = pneg %p55
        %p236 = pneg %p52
        %p237 = scmp.lt.s32.totalorder %s24, 1
        %s238 = scalar_select %p237, %s24, 1
        %s239 = smul.addr %s238, 4
        %s240 = scalar_lea.vmem %s1, %s239
        %p241 = pneg %p81
        %p242 = pneg %p78
        %p243 = pneg %p102
        %p244 = pneg %p99
        %p245 = pneg %p123
        %p246 = pneg %p120
        %p247 = pneg %p151
        %p248 = pneg %p148
        %s249 = sand.u32 %s138, 1
        %s250 = scalar_lea.sflag [#allocation4], %s249
        %s251 = sand.u32 %s138, 1
        %s252 = smul.addr %s251, 4
        %s253 = scalar_lea.vmem [#allocation3], %s252
        %p254 = pneg %p179
        %p255 = pneg %p176
        %p256 = scmp.lt.s32.totalorder %s24, 1
        %s257 = scalar_select %p256, %s24, 1
        %p258 = scmp.lt.s32.totalorder %s25, 0
        %s259 = scalar_select %p258, %s25, 0
        %s260 = sadd.s32 %s259, %s257
        %s261 = smul.addr %s260, 8
        %s262 = scalar_lea.vmem %s5, %s261
        %p263 = scmp.lt.s32.totalorder %s24, 1
        %s264 = scalar_select %p263, %s24, 1
        %p265 = scmp.lt.s32.totalorder %s25, 0
        %s266 = scalar_select %p265, %s25, 0
        %s267 = sadd.s32 %s266, %s264
        %s268 = smul.addr %s267, 4
        %s269 = scalar_lea.vmem %s0, %s268
        %p270 = scmp.lt.s32.totalorder %s24, 1
        %s271 = scalar_select %p270, %s24, 1
        %s272 = smul.addr %s271, 4
        %s273 = scalar_lea.vmem %s1, %s272
        %p274 = scmp.lt.s32.totalorder %s24, 1
        %s275 = scalar_select %p274, %s24, 1
        %p276 = scmp.lt.s32.totalorder %s25, 0
        %s277 = scalar_select %p276, %s25, 0
        %s278 = sadd.s32 %s277, %s275
        %s279 = smul.addr %s278, 8
        %s280 = scalar_lea.vmem %s5, %s279
        %p282 = scmp.eq.s32.totalorder %s25, 0
        // Predicated region
        $region37: #{_cross_attention_device.1} parent=35 // pred_check
          %p283 = pneg %p282
        $region38: #{_cross_attention_device.1} parent=35 // pred_check_branch
          %285 = sbr.rel (%p283) target = $region40
        $region39: #{_cross_attention_device.1} parent=35 // pred_region
          %v286 = vld [vmem:[%s273] sm:$0xf]
          %v287 = vld [vmem:[%s3] sm:$0xf]
          %v288 = vld [vmem:[%s3 + $0x4] sm:$0xf]
          %v289 = vld [vmem:[%s3 + $0x8] sm:$0xf]
          %v290 = vld [vmem:[%s3 + $0xc] sm:$0xf]
          %v291 = vld [vmem:[%s3 + $0x10] sm:$0xf]
          %v292 = vld [vmem:[%s3 + $0x14] sm:$0xf]
          %v293 = vld [vmem:[%s3 + $0x18] sm:$0xf]
          %v294 = vld [vmem:[%s3 + $0x1c] sm:$0xf]
          %v295 = vld [vmem:[%s3 + $0x20] sm:$0xf]
          %v296 = vld [vmem:[%s3 + $0x24] sm:$0xf]
          %v297 = vld [vmem:[%s3 + $0x28] sm:$0xf]
          %v298 = vld [vmem:[%s3 + $0x2c] sm:$0xf]
          %v299 = vld [vmem:[%s3 + $0x30] sm:$0xf]
          %v300 = vld [vmem:[%s3 + $0x34] sm:$0xf]
          %v301 = vld [vmem:[%s3 + $0x38] sm:$0xf]
          %v302 = vld [vmem:[%s3 + $0x3c] sm:$0xf]
          %v319 = vunpack.c.l.b16 %v287
          %v320 = vunpack.c.l.b16 %v288
          %v321 = vunpack.c.l.b16 %v289
          %v322 = vunpack.c.l.b16 %v290
          %v323 = vunpack.c.l.b16 %v291
          %v324 = vunpack.c.l.b16 %v292
          %v325 = vunpack.c.l.b16 %v293
          %v326 = vunpack.c.l.b16 %v294
          %v327 = vunpack.c.l.b16 %v295
          %v328 = vunpack.c.l.b16 %v296
          %v329 = vunpack.c.l.b16 %v297
          %v330 = vunpack.c.l.b16 %v298
          %v331 = vunpack.c.l.b16 %v299
          %v332 = vunpack.c.l.b16 %v300
          %v333 = vunpack.c.l.b16 %v301
          %v334 = vunpack.c.l.b16 %v302
          %v335 = vpack.c.b16 %v320, %v319
          %v336 = vpack.c.b16 %v322, %v321
          %v337 = vpack.c.b16 %v324, %v323
          %v338 = vpack.c.b16 %v326, %v325
          %v339 = vpack.c.b16 %v328, %v327
          %v340 = vpack.c.b16 %v330, %v329
          %v341 = vpack.c.b16 %v332, %v331
          %v342 = vpack.c.b16 %v334, %v333
          %351 = vmatprep.subr.bf16.mxu0 0
          %352 = vmatpush1.bf16.msra.mxu0 %v335
          %353 = vmatprep.subr.bf16.mxu0 0
          %354 = vmatpush1.bf16.msra.mxu0 %v336
          %355 = vmatprep.subr.bf16.mxu0 0
          %356 = vmatpush1.bf16.msra.mxu0 %v337
          %357 = vmatprep.subr.bf16.mxu0 0
          %358 = vmatpush1.bf16.msra.mxu0 %v338
          %359 = vmatprep.subr.bf16.mxu0 0
          %360 = vmatpush1.bf16.msra.mxu0 %v339
          %361 = vmatprep.subr.bf16.mxu0 0
          %362 = vmatpush1.bf16.msra.mxu0 %v340
          %363 = vmatprep.subr.bf16.mxu0 0
          %364 = vmatpush1.bf16.msra.mxu0 %v341
          %365 = vmatprep.subr.bf16.mxu0 0
          %366 = vmatpush1.bf16.msra.mxu0 %v342
          %367 = vmatprep.subr.bf16.mxu0 0
          %368 = vmatpush1.bf16.msra.mxu0 0
          %369 = vmatprep.subr.bf16.mxu0 0
          %370 = vmatpush1.bf16.msra.mxu0 0
          %371 = vmatprep.subr.bf16.mxu0 0
          %372 = vmatpush1.bf16.msra.mxu0 0
          %373 = vmatprep.subr.bf16.mxu0 0
          %374 = vmatpush1.bf16.msra.mxu0 0
          %375 = vmatprep.subr.bf16.mxu0 0
          %376 = vmatpush1.bf16.msra.mxu0 0
          %377 = vmatprep.subr.bf16.mxu0 0
          %378 = vmatpush1.bf16.msra.mxu0 0
          %379 = vmatprep.subr.bf16.mxu0 0
          %380 = vmatpush1.bf16.msra.mxu0 0
          %381 = vmatprep.subr.bf16.mxu0 0
          %382 = vmatpush1.bf16.msra.mxu0 0
          %383 = vmatprep.mubr.bf16.mxu0 0
          %384 = vmatmul.mubr.bf16.gmra.mrb[0].mxu0 %v286
          %v385 = vpop.f32.mrb[0].mxu0
          %v386 = vadd.f32 0.0, %v385
          %v387 = vpop.f32.mrb[0].mxu0
          %v388 = vpop.f32.mrb[0].mxu0
          %v389 = vpop.f32.mrb[0].mxu0
          %390 = vdwg.mxu0
          %v391 = vpack.c.bf16 %v386, %v386
          %392 = vst [vmem:[#allocation2] sm:$0xf] %v391
        $region40: #{_cross_attention_device.1} parent=35 // pred_fallthru
          _
        %v393 = vld [vmem:[%s269] sm:$0xf]
        %v394 = vld [vmem:[%s2] sm:$0xf]
        %v395 = vld [vmem:[%s2 + $0x4] sm:$0xf]
        %v396 = vld [vmem:[%s2 + $0x8] sm:$0xf]
        %v397 = vld [vmem:[%s2 + $0xc] sm:$0xf]
        %v398 = vld [vmem:[%s2 + $0x10] sm:$0xf]
        %v399 = vld [vmem:[%s2 + $0x14] sm:$0xf]
        %v400 = vld [vmem:[%s2 + $0x18] sm:$0xf]
        %v401 = vld [vmem:[%s2 + $0x1c] sm:$0xf]
        %v402 = vld [vmem:[%s2 + $0x20] sm:$0xf]
        %v403 = vld [vmem:[%s2 + $0x24] sm:$0xf]
        %v404 = vld [vmem:[%s2 + $0x28] sm:$0xf]
        %v405 = vld [vmem:[%s2 + $0x2c] sm:$0xf]
        %v406 = vld [vmem:[%s2 + $0x30] sm:$0xf]
        %v407 = vld [vmem:[%s2 + $0x34] sm:$0xf]
        %v408 = vld [vmem:[%s2 + $0x38] sm:$0xf]
        %v409 = vld [vmem:[%s2 + $0x3c] sm:$0xf]
        %v426 = vunpack.c.l.b16 %v394
        %v427 = vunpack.c.l.b16 %v395
        %v428 = vunpack.c.l.b16 %v396
        %v429 = vunpack.c.l.b16 %v397
        %v430 = vunpack.c.l.b16 %v398
        %v431 = vunpack.c.l.b16 %v399
        %v432 = vunpack.c.l.b16 %v400
        %v433 = vunpack.c.l.b16 %v401
        %v434 = vunpack.c.l.b16 %v402
        %v435 = vunpack.c.l.b16 %v403
        %v436 = vunpack.c.l.b16 %v404
        %v437 = vunpack.c.l.b16 %v405
        %v438 = vunpack.c.l.b16 %v406
        %v439 = vunpack.c.l.b16 %v407
        %v440 = vunpack.c.l.b16 %v408
        %v441 = vunpack.c.l.b16 %v409
        %v442 = vpack.c.b16 %v427, %v426
        %v443 = vpack.c.b16 %v429, %v428
        %v444 = vpack.c.b16 %v431, %v430
        %v445 = vpack.c.b16 %v433, %v432
        %v446 = vpack.c.b16 %v435, %v434
        %v447 = vpack.c.b16 %v437, %v436
        %v448 = vpack.c.b16 %v439, %v438
        %v449 = vpack.c.b16 %v441, %v440
        %458 = vmatprep.subr.bf16.mxu0 0
        %459 = vmatpush1.bf16.msra.mxu0 %v442
        %460 = vmatprep.subr.bf16.mxu0 0
        %461 = vmatpush1.bf16.msra.mxu0 %v443
        %462 = vmatprep.subr.bf16.mxu0 0
        %463 = vmatpush1.bf16.msra.mxu0 %v444
        %464 = vmatprep.subr.bf16.mxu0 0
        %465 = vmatpush1.bf16.msra.mxu0 %v445
        %466 = vmatprep.subr.bf16.mxu0 0
        %467 = vmatpush1.bf16.msra.mxu0 %v446
        %468 = vmatprep.subr.bf16.mxu0 0
        %469 = vmatpush1.bf16.msra.mxu0 %v447
        %470 = vmatprep.subr.bf16.mxu0 0
        %471 = vmatpush1.bf16.msra.mxu0 %v448
        %472 = vmatprep.subr.bf16.mxu0 0
        %473 = vmatpush1.bf16.msra.mxu0 %v449
        %474 = vmatprep.subr.bf16.mxu0 0
        %475 = vmatpush1.bf16.msra.mxu0 0
        %476 = vmatprep.subr.bf16.mxu0 0
        %477 = vmatpush1.bf16.msra.mxu0 0
        %478 = vmatprep.subr.bf16.mxu0 0
        %479 = vmatpush1.bf16.msra.mxu0 0
        %480 = vmatprep.subr.bf16.mxu0 0
        %481 = vmatpush1.bf16.msra.mxu0 0
        %482 = vmatprep.subr.bf16.mxu0 0
        %483 = vmatpush1.bf16.msra.mxu0 0
        %484 = vmatprep.subr.bf16.mxu0 0
        %485 = vmatpush1.bf16.msra.mxu0 0
        %486 = vmatprep.subr.bf16.mxu0 0
        %487 = vmatpush1.bf16.msra.mxu0 0
        %488 = vmatprep.subr.bf16.mxu0 0
        %489 = vmatpush1.bf16.msra.mxu0 0
        %490 = vmatprep.mubr.bf16.mxu0 0
        %491 = vmatmul.mubr.bf16.gmra.mrb[0].mxu0 %v393
        %v492 = vpop.f32.mrb[0].mxu0
        %v493 = vadd.f32 0.0, %v492
        %v494 = vpop.f32.mrb[0].mxu0
        %v495 = vpop.f32.mrb[0].mxu0
        %v496 = vpop.f32.mrb[0].mxu0
        %497 = vdwg.mxu0
        %v498 = vmul.f32 %v493, 0.17677669
        %v499 = vpack.c.bf16 %v498, %v498
        %v500 = vld [vmem:[#allocation2] sm:$0xf]
        %501 = vmatprep.subr.bf16.mxu0 0
        %502 = vmatpush1.bf16.xpose.msra.mxu0 %v500
        %503 = vmatprep.subr.bf16.mxu0 0
        %504 = vmatpush1.bf16.xpose.msra.mxu0 0
        %505 = vmatprep.subr.bf16.mxu0 0
        %506 = vmatpush1.bf16.xpose.msra.mxu0 0
        %507 = vmatprep.subr.bf16.mxu0 0
        %508 = vmatpush1.bf16.xpose.msra.mxu0 0
        %509 = vmatprep.subr.bf16.mxu0 0
        %510 = vmatpush1.bf16.xpose.msra.mxu0 0
        %511 = vmatprep.subr.bf16.mxu0 0
        %512 = vmatpush1.bf16.xpose.msra.mxu0 0
        %513 = vmatprep.subr.bf16.mxu0 0
        %514 = vmatpush1.bf16.xpose.msra.mxu0 0
        %515 = vmatprep.subr.bf16.mxu0 0
        %516 = vmatpush1.bf16.xpose.msra.mxu0 0
        %517 = vmatprep.subr.bf16.mxu0 0
        %518 = vmatpush1.bf16.xpose.msra.mxu0 0
        %519 = vmatprep.subr.bf16.mxu0 0
        %520 = vmatpush1.bf16.xpose.msra.mxu0 0
        %521 = vmatprep.subr.bf16.mxu0 0
        %522 = vmatpush1.bf16.xpose.msra.mxu0 0
        %523 = vmatprep.subr.bf16.mxu0 0
        %524 = vmatpush1.bf16.xpose.msra.mxu0 0
        %525 = vmatprep.subr.bf16.mxu0 0
        %526 = vmatpush1.bf16.xpose.msra.mxu0 0
        %527 = vmatprep.subr.bf16.mxu0 0
        %528 = vmatpush1.bf16.xpose.msra.mxu0 0
        %529 = vmatprep.subr.bf16.mxu0 0
        %530 = vmatpush1.bf16.xpose.msra.mxu0 0
        %531 = vmatprep.subr.bf16.mxu0 0
        %532 = vmatpush1.bf16.xpose.msra.mxu0 0
        %533 = vmatprep.mubr.bf16.mxu0 0
        %534 = vmatmul.mubr.bf16.gmra.mrb[0].mxu0 %v499
        %v535 = vpop.f32.mrb[0].mxu0
        %v536 = vadd.f32 0.0, %v535
        %v537 = vpop.f32.mrb[0].mxu0
        %v538 = vpop.f32.mrb[0].mxu0
        %v539 = vpop.f32.mrb[0].mxu0
        %540 = vdwg.mxu0
        %vm541 = vcmask 64512
        %v542 = vsel %vm541, %v536, -inf
        %543 = vmax.xlane.f32.xlu0 %v542
        %v544 = vpop.xlane.xlu0 %543
        %v545 = vlaneseq
        %v546 = vand.u32 %v545, 127
        %vm547 = vcmp.eq.f32.partialorder %v536, %v544
        %v548 = vsel %vm547, %v546, 8
        %v549 = vsel %vm541, %v548, 2147483647
        %v550 = vand.u32 %v549, 65535
        %v551 = vshra.s32 %v549, 16
        %v552 = vcvt.s32.f32 %v550
        %v553 = vcvt.s32.f32 %v551
        %554 = vmin.xlane.f32.xlu0 %v553
        %v555 = vpop.xlane.xlu0 %554
        %vm556 = vcmp.eq.f32.partialorder %v553, %v555
        %v557 = vsel %vm556, %v552, inf
        %558 = vmin.xlane.f32.xlu0 %v557
        %v559 = vpop.xlane.xlu0 %558
        %v560 = vcvt.f32.s32 %v559
        %v561 = vcvt.f32.s32 %v555
        %v562 = vshll.u32 %v561, 16
        %v563 = vadd.s32 %v562, %v560
        %v564 = vsub.f32 %v536, %v544
        %v565 = vmul.f32 %v564, 1.442695
        %v566 = vpow.pop %v565
        %v567 = vsel %vm541, %v566, 0.0
        %568 = vadd.xlane.f32.xlu0 %v567
        %v569 = vpop.xlane.xlu0 %568
        %v570 = vrcp.pop %v569
        %v571 = vmul.f32 %v566, %v570
        %v572 = vpack.c.bf16 %v571, %v571
        %v573 = vld [vmem:[%s273] sm:$0xf]
        %v575 = vsel %vm541, %v572, 0
        %vm577 = vcmask 1043456
        %v579 = vsel %vm577, %v573, 0
        %581 = vmatprep.subr.bf16.mxu0 0
        %582 = vmatpush1.bf16.msra.mxu0 %v579
        %583 = vmatprep.subr.bf16.mxu0 0
        %584 = vmatpush1.bf16.msra.mxu0 0
        %585 = vmatprep.subr.bf16.mxu0 0
        %586 = vmatpush1.bf16.msra.mxu0 0
        %587 = vmatprep.subr.bf16.mxu0 0
        %588 = vmatpush1.bf16.msra.mxu0 0
        %589 = vmatprep.subr.bf16.mxu0 0
        %590 = vmatpush1.bf16.msra.mxu0 0
        %591 = vmatprep.subr.bf16.mxu0 0
        %592 = vmatpush1.bf16.msra.mxu0 0
        %593 = vmatprep.subr.bf16.mxu0 0
        %594 = vmatpush1.bf16.msra.mxu0 0
        %595 = vmatprep.subr.bf16.mxu0 0
        %596 = vmatpush1.bf16.msra.mxu0 0
        %597 = vmatprep.subr.bf16.mxu0 0
        %598 = vmatpush1.bf16.msra.mxu0 0
        %599 = vmatprep.subr.bf16.mxu0 0
        %600 = vmatpush1.bf16.msra.mxu0 0
        %601 = vmatprep.subr.bf16.mxu0 0
        %602 = vmatpush1.bf16.msra.mxu0 0
        %603 = vmatprep.subr.bf16.mxu0 0
        %604 = vmatpush1.bf16.msra.mxu0 0
        %605 = vmatprep.subr.bf16.mxu0 0
        %606 = vmatpush1.bf16.msra.mxu0 0
        %607 = vmatprep.subr.bf16.mxu0 0
        %608 = vmatpush1.bf16.msra.mxu0 0
        %609 = vmatprep.subr.bf16.mxu0 0
        %610 = vmatpush1.bf16.msra.mxu0 0
        %611 = vmatprep.subr.bf16.mxu0 0
        %612 = vmatpush1.bf16.msra.mxu0 0
        %613 = vmatprep.mubr.bf16.mxu0 0
        %614 = vmatmul.mubr.bf16.gmra.mrb[0].mxu0 %v575
        %v615 = vpop.f32.mrb[0].mxu0
        %v616 = vadd.f32 0.0, %v615
        %v617 = vpop.f32.mrb[0].mxu0
        %v618 = vpop.f32.mrb[0].mxu0
        %v619 = vpop.f32.mrb[0].mxu0
        %620 = vdwg.mxu0
        %v621 = vpack.c.bf16 %v616, %v616
        %622 = vst [vmem:[%s253] sm:$0xf] %v621
        %vm623 = vcmask 7168
        %624 = vst.msk [vmem:[%s280] sm:$0xff] %vm623, %v563
        %s625 = sand.u32 %s138, 1
        %s626 = scalar_lea.sflag [#allocation4], %s625
        %s627 = sand.u32 %s138, 1
        %s628 = smul.addr %s627, 4
        %s629 = scalar_lea.vmem [#allocation3], %s628
        %p630 = scmp.lt.s32.totalorder %s24, 1
        %s631 = scalar_select %p630, %s24, 1
        %p632 = scmp.lt.s32.totalorder %s25, 0
        %s633 = scalar_select %p632, %s25, 0
        %s634 = sadd.s32 %s633, %s631
        %s635 = smul.addr %s634, 8
        %s636 = scalar_lea.vmem %s5, %s635
        // Predicated region
        $region41: #{_cross_attention_device.1} parent=35 // pred_check
          %p637 = pneg %p148
        $region42: #{_cross_attention_device.1} parent=35 // pred_check_branch
          %639 = sbr.rel (%p637) target = $region44
        $region43: #{_cross_attention_device.1} parent=35 // pred_region
          %s641 = ssub.s32 64, 64
          %642 = vsyncadd %s626, %s641
          %s643 = sadd.s32 %s25, %s24
          %s644 = smul.addr %s643, 64
          %s645 = scalar_lea.hbm %s4, %s644
          %s647 = sshll.u32 %s629, 4
          %s648 = int_to_ptr.vmem [resolvable:$true] %s647
          %650 = dma.vmem_to_hbm [thread:$0]  %s648, 64, %s645, %s626
        $region44: #{_cross_attention_device.1} parent=35 // pred_fallthru
          _
        // Predicated region
        $region45: #{_cross_attention_device.1} parent=35 // pred_check
          %p651 = pneg %p176
        $region46: #{_cross_attention_device.1} parent=35 // pred_check_branch
          %653 = sbr.rel (%p651) target = $region48
        $region47: #{_cross_attention_device.1} parent=35 // pred_region
          _
        $region48: #{_cross_attention_device.1} parent=35 // pred_fallthru
          _
      $region36: #{_cross_attention_device.1} parent=5 // pred_fallthru
        _
      %p654 = scmp.le.s32.totalorder 2, %s15
      // Predicated region
      $region49: #{_cross_attention_device.1} parent=5 // pred_check
        %p655 = pneg %p654
      $region50: #{_cross_attention_device.1} parent=5 // pred_check_branch
        %657 = sbr.rel (%p655) target = $region52
      $region51: #{_cross_attention_device.1} parent=5 // pred_region
        %s658 = ssub.s32 %s15, 2
        // Predicated region
        $region53: #{_cross_attention_device.1} parent=51 // pred_check
          %p659 = pneg %p154
        $region54: #{_cross_attention_device.1} parent=51 // pred_check_branch
          %661 = sbr.rel (%p659) target = $region56
        $region55: #{_cross_attention_device.1} parent=51 // pred_region
          %s662 = sand.u32 %s139, 1
          %s663 = scalar_lea.sflag [#allocation4], %s662
          %s664 = sand.u32 %s139, 1
          %s665 = smul.addr %s664, 4
          %s666 = scalar_lea.vmem [#allocation3], %s665
          %667 = dma.done %s663, 64
        $region56: #{_cross_attention_device.1} parent=51 // pred_fallthru
          _
        // Predicated region
        $region57: #{_cross_attention_device.1} parent=51 // pred_check
          %p668 = pneg %p182
        $region58: #{_cross_attention_device.1} parent=51 // pred_check_branch
          %670 = sbr.rel (%p668) target = $region60
        $region59: #{_cross_attention_device.1} parent=51 // pred_region
          %p671 = scmp.lt.s32.totalorder %s26, 1
          %s672 = scalar_select %p671, %s26, 1
          %p673 = scmp.lt.s32.totalorder %s27, 0
          %s674 = scalar_select %p673, %s27, 0
          %s675 = sadd.s32 %s674, %s672
          %s676 = smul.addr %s675, 8
          %s677 = scalar_lea.vmem %s5, %s676
        $region60: #{_cross_attention_device.1} parent=51 // pred_fallthru
          _
      $region52: #{_cross_attention_device.1} parent=5 // pred_fallthru
        _
    $region6: #{_cross_attention_device.1} parent=1 // loop_footer
      %s19 = sadd.s32 1, %s15
    $region7: #{_cross_attention_device.1} parent=1 // loop_footer_branch
      %14 = sbr.rel target = $region3
    $region8: #{_cross_attention_device.1} parent=1 // loop_exit
      _
    %678 = vsyncpa [#allocation4], 1
    %s679 = scalar_lea.sflag [#allocation4], 1
    %680 = vsyncpa %s679, 1

</llo_original>
